<compile_context>
chip_gen: v5e
topology: v5e:2x2
jax: 0.10.0
libtpu: 0.0.40
codegen_flags: <defaults>
</compile_context>

<pallas_src>
import functools

import jax
import jax.numpy as jnp
from jax import lax
from jax.experimental import pallas as pl
from jax.experimental.pallas import tpu as pltpu

LEAKY_SLOPE = 0.2
BN_EPS = 1e-5
COMPUTE_DTYPE = jnp.bfloat16          # MXU input dtype (accumulation stays f32)
VMEM_LIMIT = 48 * 1024 * 1024         # explicit scoped-VMEM budget (fits v7x 64 MiB)


def _round_up(x, m):
    return ((x + m - 1) // m) * m


# ----------------------------------------------------------------------------
# Kernel 1: tiled conv-as-matmul, fused bias (+ optional LeakyReLU), optional
#           per-channel sum / sum-of-squares outputs for BatchNorm.
# ----------------------------------------------------------------------------
def _conv_matmul_kernel(*refs, leaky_slope, compute_stats):
    if compute_stats:
        a_ref, w_ref, b_ref, o_ref, stats_ref, acc_ref = refs
    else:
        a_ref, w_ref, b_ref, o_ref, acc_ref = refs
        stats_ref = None

    k = pl.program_id(2)

    @pl.when(k == 0)
    def _():
        acc_ref[...] = jnp.zeros_like(acc_ref)

    acc_ref[...] += jnp.dot(a_ref[...], w_ref[...],
                            preferred_element_type=jnp.float32)

    @pl.when(k == pl.num_programs(2) - 1)
    def _():
        y = acc_ref[...] + b_ref[...]                       # f32 epilogue
        if compute_stats:
            # BN stats on the pre-activation conv output. Padded rows are all-zero
            # (bias is 0 for BN layers), so they contribute nothing to the sums.
            s1 = jnp.sum(y, axis=0, keepdims=True)          # (1, tn)
            s2 = jnp.sum(y * y, axis=0, keepdims=True)      # (1, tn)
            pad = jnp.zeros((6, y.shape[1]), jnp.float32)
            stats_ref[...] = jnp.concatenate([s1, s2, pad], axis=0)
        if leaky_slope is not None:
            y = jnp.where(y >= 0, y, leaky_slope * y)
        o_ref[...] = y.astype(o_ref.dtype)


def pallas_conv_matmul(a, w, b, *, leaky_slope=None, compute_stats=False,
                       tm=256, tn=256, tk=512):
    """a: [M, K], w: [K, N], b: [N].
    Returns (y_pad [M_pad, N_pad] f32, ch_sum [N] | None, ch_sumsq [N] | None)."""
    M, K = a.shape
    K2, N = w.shape
    assert K2 == K

    tm_ = min(tm, _round_up(M, 8))
    tn_ = min(tn, _round_up(N, 128))
    tk_ = min(tk, _round_up(K, 128))
    M_pad = _round_up(M, tm_)
    N_pad = _round_up(N, tn_)
    K_pad = _round_up(K, tk_)
    n_i, n_j, n_k = M_pad // tm_, N_pad // tn_, K_pad // tk_

    a_p = jnp.pad(a, ((0, M_pad - M), (0, K_pad - K))).astype(COMPUTE_DTYPE)
    w_p = jnp.pad(w, ((0, K_pad - K), (0, N_pad - N))).astype(COMPUTE_DTYPE)
    b_p = jnp.pad(b.astype(jnp.float32), (0, N_pad - N)).reshape(1, N_pad)

    in_specs = [
        pl.BlockSpec((tm_, tk_), lambda i, j, k: (i, k)),
        pl.BlockSpec((tk_, tn_), lambda i, j, k: (k, j)),
        pl.BlockSpec((1, tn_), lambda i, j, k: (0, j)),
    ]
    if compute_stats:
        out_shape = (jax.ShapeDtypeStruct((M_pad, N_pad), jnp.float32),
                     jax.ShapeDtypeStruct((8 * n_i, N_pad), jnp.float32))
        out_specs = (pl.BlockSpec((tm_, tn_), lambda i, j, k: (i, j)),
                     pl.BlockSpec((8, tn_), lambda i, j, k: (i, j)))
    else:
        out_shape = jax.ShapeDtypeStruct((M_pad, N_pad), jnp.float32)
        out_specs = pl.BlockSpec((tm_, tn_), lambda i, j, k: (i, j))

    bytes_in = int(a_p.size * a_p.dtype.itemsize + w_p.size * w_p.dtype.itemsize)
    cost = pl.CostEstimate(flops=int(2 * M_pad * K_pad * N_pad),
                           transcendentals=0,
                           bytes_accessed=int(bytes_in + M_pad * N_pad * 4))

    res = pl.pallas_call(
        functools.partial(_conv_matmul_kernel, leaky_slope=leaky_slope,
                          compute_stats=compute_stats),
        out_shape=out_shape,
        grid_spec=pltpu.PrefetchScalarGridSpec(
            num_scalar_prefetch=0,
            grid=(n_i, n_j, n_k),
            in_specs=in_specs,
            out_specs=out_specs,
            scratch_shapes=[pltpu.VMEM((tm_, tn_), jnp.float32)],
        ),
        compiler_params=pltpu.CompilerParams(
            dimension_semantics=("parallel", "parallel", "arbitrary"),
            vmem_limit_bytes=VMEM_LIMIT,
        ),
        cost_estimate=cost,
    )(a_p, w_p, b_p)

    if compute_stats:
        y_pad, stats = res
        stats = stats.reshape(n_i, 8, N_pad)
        ch_sum = jnp.sum(stats[:, 0, :N], axis=0)
        ch_sumsq = jnp.sum(stats[:, 1, :N], axis=0)
        return y_pad, ch_sum, ch_sumsq
    y_pad = res[0] if isinstance(res, (list, tuple)) else res
    return y_pad, None, None


# ----------------------------------------------------------------------------
# Kernel 2: row-tiled BatchNorm affine + LeakyReLU (scale/shift precomputed).
# ----------------------------------------------------------------------------
def _scale_shift_leaky_kernel(x_ref, s_ref, t_ref, o_ref, *, leaky_slope):
    y = x_ref[...] * s_ref[...] + t_ref[...]
    o_ref[...] = jnp.where(y >= 0, y, leaky_slope * y).astype(o_ref.dtype)


def pallas_scale_shift_leaky(x, scale, shift, leaky_slope, max_rows=1024):
    M, C = x.shape                 # M multiple of 8, C multiple of 128 (padded upstream)
    bm = min(max_rows, M)
    while M % bm:
        bm -= 8
    n_i = M // bm
    cost = pl.CostEstimate(flops=int(3 * M * C), transcendentals=0,
                           bytes_accessed=int(2 * M * C * 4))
    return pl.pallas_call(
        functools.partial(_scale_shift_leaky_kernel, leaky_slope=leaky_slope),
        out_shape=jax.ShapeDtypeStruct((M, C), jnp.float32),
        grid=(n_i,),
        in_specs=[
            pl.BlockSpec((bm, C), lambda i: (i, 0)),
            pl.BlockSpec((1, C), lambda i: (0, 0)),
            pl.BlockSpec((1, C), lambda i: (0, 0)),
        ],
        out_specs=pl.BlockSpec((bm, C), lambda i: (i, 0)),
        compiler_params=pltpu.CompilerParams(
            dimension_semantics=("parallel",),
            vmem_limit_bytes=VMEM_LIMIT,
        ),
        cost_estimate=cost,
    )(x, scale.reshape(1, C).astype(jnp.float32),
      shift.reshape(1, C).astype(jnp.float32))


# ----------------------------------------------------------------------------
# Glue: im2col (pure slicing / reshaping in XLA)
# ----------------------------------------------------------------------------
def _im2col(x_nhwc, k, stride, pad):
    # TODO(synk): avoid the k*k x HBM materialization by putting the kh*kw taps on
    # the matmul grid (or DMA-ing input tiles + halo inside the kernel).
    n, h, w, c = x_nhwc.shape
    xp = jnp.pad(x_nhwc, ((0, 0), (pad, pad), (pad, pad), (0, 0)))
    hout = (h + 2 * pad - k) // stride + 1
    wout = (w + 2 * pad - k) // stride + 1
    cols = []
    for i in range(k):
        for j in range(k):
            cols.append(xp[:, i:i + (hout - 1) * stride + 1:stride,
                              j:j + (wout - 1) * stride + 1:stride, :])
    patches = jnp.concatenate(cols, axis=-1)           # (N, Hout, Wout, k*k*C)
    return patches.reshape(n * hout * wout, k * k * c), (n, hout, wout)


def _discriminator_layer(x_nhwc, p):
    kh, kw, cin, cout = p["w"].shape
    # cast activations once to the MXU compute dtype (halves im2col + matmul traffic)
    patches, (n, hout, wout) = _im2col(x_nhwc.astype(COMPUTE_DTYPE), kh, p["stride"], 1)
    M = n * hout * wout
    w2d = p["w"].reshape(kh * kw * cin, cout)
    use_bn = p["bn"] is not None
    fused_slope = None if use_bn else (LEAKY_SLOPE if p["act"] == "leaky" else None)

    y_pad, ch_sum, ch_sumsq = pallas_conv_matmul(
        patches, w2d, p["b"], leaky_slope=fused_slope, compute_stats=use_bn)

    if use_bn:
        gamma, beta = p["bn"]
        mean = ch_sum / M
        var = jnp.maximum(ch_sumsq / M - mean * mean, 0.0)   # biased training-mode var
        inv = gamma * lax.rsqrt(var + BN_EPS)
        scale, shift = inv, beta - mean * inv
        n_pad = y_pad.shape[1]
        scale = jnp.pad(scale, (0, n_pad - cout))
        shift = jnp.pad(shift, (0, n_pad - cout))
        y_pad = pallas_scale_shift_leaky(y_pad, scale, shift, LEAKY_SLOPE)

    y = y_pad[:M, :cout]
    return y.reshape(n, hout, wout, cout)


# ----------------------------------------------------------------------------
# Parameter construction (deterministic, mirrors NLayerDiscriminator.__init__)
# ----------------------------------------------------------------------------
def make_params(key, input_nc, ndf=64, n_layers=3):
    params = []
    kw = 4

    def conv_p(key, cin, cout, use_bias):
        kw_, kb = jax.random.split(key)
        w = 0.05 * jax.random.normal(kw_, (kw, kw, cin, cout), jnp.float32)  # HWIO
        b = (0.05 * jax.random.normal(kb, (cout,), jnp.float32)
             if use_bias else jnp.zeros((cout,), jnp.float32))
        return w, b

    def bn_p(key, c):
        kg, kb = jax.random.split(key)
        gamma = 1.0 + 0.05 * jax.random.normal(kg, (c,), jnp.float32)
        beta = 0.05 * jax.random.normal(kb, (c,), jnp.float32)
        return gamma, beta

    keys = jax.random.split(key, 16)
    ki = iter(range(16))

    # layer 1: Conv(input_nc, ndf, s=2, bias=True) + LeakyReLU  (no norm)
    w, b = conv_p(keys[next(ki)], input_nc, ndf, use_bias=True)
    params.append(dict(w=w, b=b, stride=2, bn=None, act="leaky"))

    # middle stride-2 layers: Conv(bias=False) + BN + LeakyReLU
    nf_mult = 1
    for n in range(1, n_layers):
        nf_prev, nf_mult = nf_mult, min(2 ** n, 8)
        w, b = conv_p(keys[next(ki)], ndf * nf_prev, ndf * nf_mult, use_bias=False)
        g, bt = bn_p(keys[next(ki)], ndf * nf_mult)
        params.append(dict(w=w, b=b, stride=2, bn=(g, bt), act="leaky"))

    # stride-1 layer: Conv(bias=False) + BN + LeakyReLU
    nf_prev, nf_mult = nf_mult, min(2 ** n_layers, 8)
    w, b = conv_p(keys[next(ki)], ndf * nf_prev, ndf * nf_mult, use_bias=False)
    g, bt = bn_p(keys[next(ki)], ndf * nf_mult)
    params.append(dict(w=w, b=b, stride=1, bn=(g, bt), act="leaky"))

    # final: Conv(ndf*nf_mult, 1, s=1, bias=True), no activation (use_sigmoid=False)
    w, b = conv_p(keys[next(ki)], ndf * nf_mult, 1, use_bias=True)
    params.append(dict(w=w, b=b, stride=1, bn=None, act=None))
    return params


# ----------------------------------------------------------------------------
# Forward pass (Pallas) and reference (same bf16 MXU input precision, f32 accum)
# ----------------------------------------------------------------------------
def nlayer_discriminator_pallas(x_nchw, params):
    x = jnp.transpose(x_nchw, (0, 2, 3, 1))    # NCHW -> NHWC
    for p in params:
        x = _discriminator_layer(x, p)
    return jnp.transpose(x, (0, 3, 1, 2))      # NHWC -> NCHW


def nlayer_discriminator_ref(x_nchw, params):
    x = jnp.transpose(x_nchw, (0, 2, 3, 1))
    for p in params:
        s = p["stride"]
        x = lax.conv_general_dilated(
            x.astype(COMPUTE_DTYPE), p["w"].astype(COMPUTE_DTYPE), (s, s),
            ((1, 1), (1, 1)), dimension_numbers=("NHWC", "HWIO", "NHWC"),
            preferred_element_type=jnp.float32)
        x = x + p["b"][None, None, None, :]
        if p["bn"] is not None:
            gamma, beta = p["bn"]
            mean = jnp.mean(x, axis=(0, 1, 2))
            var = jnp.mean((x - mean[None, None, None, :]) ** 2, axis=(0, 1, 2))
            x = (x - mean) / jnp.sqrt(var + BN_EPS) * gamma + beta
        if p["act"] == "leaky":
            x = jnp.where(x >= 0, x, LEAKY_SLOPE * x)
    return jnp.transpose(x, (0, 3, 1, 2))


# ----------------------------------------------------------------------------
if __name__ == "__main__":
    # small shapes: batch=2, input_nc=4, ndf=16, spatial=32
    # (32 -> 16 -> 8 -> 4 -> 3 -> 2; output is the 2x2 PatchGAN map)
    batch, input_nc, ndf, hw = 2, 4, 16, 32

    key = jax.random.PRNGKey(0)
    kx, kp = jax.random.split(key)
    x = jax.random.normal(kx, (batch, input_nc, hw, hw), jnp.float32)
    params = make_params(kp, input_nc, ndf=ndf, n_layers=3)

    out = jax.block_until_ready(nlayer_discriminator_pallas(x, params))
    ref = jax.block_until_ready(nlayer_discriminator_ref(x, params))

    assert out.shape == (batch, 1, 2, 2), out.shape
    max_err = float(jnp.max(jnp.abs(out - ref)))
    assert jnp.allclose(out, ref, atol=1e-2, rtol=1e-2), max_err
    print("KERNEL_OK")
</pallas_src>

<mosaic_0001>
module attributes {stable_mosaic.version = 11 : i64} {
  func.func @_conv_matmul_kernel(%arg0: i32, %arg1: i32, %arg2: i32, %arg3: memref<256x128xbf16, #tpu.memory_space<vmem>>, %arg4: memref<128x128xbf16, #tpu.memory_space<vmem>>, %arg5: memref<1x128xf32, #tpu.memory_space<vmem>>, %arg6: memref<256x128xf32, #tpu.memory_space<vmem>>, %arg7: memref<256x128xf32, #tpu.memory_space<vmem>>) attributes {dimension_semantics = [#tpu.dimension_semantics<parallel>, #tpu.dimension_semantics<parallel>, #tpu.dimension_semantics<arbitrary>], iteration_bounds = array<i64: 2, 1, 1>, scalar_prefetch = 0 : i64, scratch_operands = 1 : i64, tpu.core_type = #tpu.core_type<tc>, window_params = [{transform_indices = @transform_0, window_bounds = array<i64: 256, 128>}, {transform_indices = @transform_1, window_bounds = array<i64: 128, 128>}, {transform_indices = @transform_2, window_bounds = array<i64: 1, 128>}, {transform_indices = @transform_3, window_bounds = array<i64: 256, 128>}]} {
    %c0_i32 = arith.constant 0 : i32
    %0 = arith.cmpi eq, %arg2, %c0_i32 : i32
    %1 = arith.extui %0 : i1 to i32
    %c0_i32_0 = arith.constant 0 : i32
    %2 = arith.cmpi ne, %1, %c0_i32_0 : i32
    scf.if %2 {
      %cst_10 = arith.constant 0.000000e+00 : f32
      %12 = vector.broadcast %cst_10 : f32 to vector<256x128xf32>
      %c0_11 = arith.constant 0 : index
      %c0_12 = arith.constant 0 : index
      %13 = vector.load %arg7[%c0_11, %c0_12] : memref<256x128xf32, #tpu.memory_space<vmem>>, vector<256x128xf32>
      tpu.vector_store %arg7[%c0_11, %c0_12], %12 {strides = array<i32>} : memref<256x128xf32, #tpu.memory_space<vmem>>, vector<256x128xf32>,
    } else {
    }
    %c0 = arith.constant 0 : index
    %c0_1 = arith.constant 0 : index
    %3 = vector.load %arg7[%c0, %c0_1] : memref<256x128xf32, #tpu.memory_space<vmem>>, vector<256x128xf32>
    %c0_2 = arith.constant 0 : index
    %c0_3 = arith.constant 0 : index
    %4 = vector.load %arg3[%c0_2, %c0_3] : memref<256x128xbf16, #tpu.memory_space<vmem>>, vector<256x128xbf16>
    %c0_4 = arith.constant 0 : index
    %c0_5 = arith.constant 0 : index
    %5 = vector.load %arg4[%c0_4, %c0_5] : memref<128x128xbf16, #tpu.memory_space<vmem>>, vector<128x128xbf16>
    %cst = arith.constant dense<0.000000e+00> : vector<256x128xf32>
    %6 = tpu.matmul %4, %5, %cst {dimension_numbers = #tpu.dot_dimension_numbers<[1], [0], [0], [1], [0, 0, 1, 1], [], []>} : vector<256x128xbf16>, vector<128x128xbf16>, vector<256x128xf32> -> vector<256x128xf32>
    %7 = arith.addf %3, %6 : vector<256x128xf32>
    %c0_6 = arith.constant 0 : index
    %c0_7 = arith.constant 0 : index
    %8 = vector.load %arg7[%c0_6, %c0_7] : memref<256x128xf32, #tpu.memory_space<vmem>>, vector<256x128xf32>
    tpu.vector_store %arg7[%c0_6, %c0_7], %7 {strides = array<i32>} : memref<256x128xf32, #tpu.memory_space<vmem>>, vector<256x128xf32>,
    %c0_i32_8 = arith.constant 0 : i32
    %9 = arith.cmpi eq, %arg2, %c0_i32_8 : i32
    %10 = arith.extui %9 : i1 to i32
    %c0_i32_9 = arith.constant 0 : i32
    %11 = arith.cmpi ne, %10, %c0_i32_9 : i32
    scf.if %11 {
      %c0_10 = arith.constant 0 : index
      %c0_11 = arith.constant 0 : index
      %12 = vector.load %arg7[%c0_10, %c0_11] : memref<256x128xf32, #tpu.memory_space<vmem>>, vector<256x128xf32>
      %c0_12 = arith.constant 0 : index
      %c0_13 = arith.constant 0 : index
      %13 = vector.load %arg5[%c0_12, %c0_13] : memref<1x128xf32, #tpu.memory_space<vmem>>, vector<1x128xf32>
      %14 = vector.broadcast %13 : vector<1x128xf32> to vector<256x128xf32>
      %15 = arith.addf %12, %14 : vector<256x128xf32>
      %cst_14 = arith.constant 0.000000e+00 : f32
      %16 = vector.broadcast %cst_14 : f32 to vector<256x128xf32>
      %17 = arith.cmpf oge, %15, %16 : vector<256x128xf32>
      %cst_15 = arith.constant 2.000000e-01 : f32
      %18 = vector.broadcast %cst_15 : f32 to vector<256x128xf32>
      %19 = arith.mulf %18, %15 : vector<256x128xf32>
      %20 = arith.select %17, %15, %19 : vector<256x128xi1>, vector<256x128xf32>
      %c0_16 = arith.constant 0 : index
      %c0_17 = arith.constant 0 : index
      %21 = vector.load %arg6[%c0_16, %c0_17] : memref<256x128xf32, #tpu.memory_space<vmem>>, vector<256x128xf32>
      tpu.vector_store %arg6[%c0_16, %c0_17], %20 {strides = array<i32>} : memref<256x128xf32, #tpu.memory_space<vmem>>, vector<256x128xf32>,
    } else {
    }
    return
  }
  func.func @transform_0(%arg0: i32, %arg1: i32, %arg2: i32) -> (i32, i32) {
    %c0_i32 = arith.constant 0 : i32
    return %arg0, %arg2 : i32, i32
  }
  func.func @transform_1(%arg0: i32, %arg1: i32, %arg2: i32) -> (i32, i32) {
    %c0_i32 = arith.constant 0 : i32
    return %arg2, %arg1 : i32, i32
  }
  func.func @transform_2(%arg0: i32, %arg1: i32, %arg2: i32) -> (i32, i32) {
    %c0_i32 = arith.constant 0 : i32
    %c0_i32_0 = arith.constant 0 : i32
    return %c0_i32, %arg1 : i32, i32
  }
  func.func @transform_3(%arg0: i32, %arg1: i32, %arg2: i32) -> (i32, i32) {
    %c0_i32 = arith.constant 0 : i32
    return %arg0, %arg1 : i32, i32
  }
}

</mosaic_0001>

<llo_original>
// kernel: tpu_custom_call.1
$region0: #{tpu_custom_call.1}
  #allocation0 [shape = 'u32[]', space=smem, size = 0x4, offset = 0x4, fixed_abs, tag = 'smem constant byte address 0x4 - core index']
  #allocation1 [shape = 'u32[72,128]{1,0:T(1,128)}', space=vmem, size = 0x9000, scoped, tag = 'internal scratch']
  #allocation2 [shape = 'f32[256,128]{1,0:T(8,128)}', space=vmem, size = 0x20000, scoped, tag = 'scratch operand']
  %s0 = inlined_call_operand.hbm [shape: bf16[512,128], index: 0, kind: input, shape index: {}]
  %s1 = inlined_call_operand.hbm [shape: bf16[128,128], index: 1, kind: input, shape index: {}]
  %s2 = inlined_call_operand.vmem [shape: f32[1,128], index: 2, kind: input, shape index: {}]
  %s3 = inlined_call_operand.hbm [shape: f32[512,128], index: 3, kind: output, shape index: {}]
  %s4 = sld [smem:[#allocation0]]
  $region61: #{tpu_custom_call.1} parent=0
    _
  %s6 = ssub.s32 1, %s4
  %s7 = scalar_select 0, %s6, %s4
  $region1: #{tpu_custom_call.1} parent=0
    #allocation3 [shape = 'u8[131072]{0}', space=vmem, size = 0x20000, scoped, tag = 'input window, operand 0']
    #allocation4 [shape = 's32[2]{0}', space=sflag, size = 0x8, scoped, tag = 'scoped memory for tpu_custom_call.1']
    #allocation5 [shape = 's32[2]{0}', space=sflag, size = 0x8, scoped, tag = 'scoped memory for tpu_custom_call.1']
    #allocation6 [shape = 'u8[32768]{0}', space=vmem, size = 0x8000, scoped, tag = 'input window, operand 1, single buffered']
    #allocation7 [shape = 's32[1]{0}', space=sflag, size = 0x4, scoped, tag = 'scoped memory for tpu_custom_call.1']
    #allocation8 [shape = 'u8[262144]{0}', space=vmem, size = 0x40000, scoped, tag = 'output window, operand 0']
    %8 = vsyncpa [#allocation4], 0
    %s9 = scalar_lea.sflag [#allocation4], 1
    %10 = vsyncpa %s9, 0
    %11 = vsyncpa [#allocation7], 0
    %12 = vsyncpa [#allocation5], 0
    %s13 = scalar_lea.sflag [#allocation5], 1
    %14 = vsyncpa %s13, 0
    loop: start=0, step=1, limit=4
    $region2: #{tpu_custom_call.1} parent=1 // loop_pre_header
      _
    $region3: #{tpu_custom_call.1} parent=1 // loop_header
      %s16 = sphi 0, %s20
      %p17 = scmp.ge.s32.totalorder %s16, 4
      %s23 = sphi 0, %s42
      %s24 = sphi 0, %s38
      %s25 = sphi 0, %s34
      %s26 = sphi 0, %s23
      %s27 = sphi 0, %s24
      %s28 = sphi 0, %s25
      %s29 = sphi 0, %s26
      %s30 = sphi 0, %s27
      %s31 = sphi 0, %s28
      %s47 = sphi 0, %s49
      %s50 = sphi 0, %s47
      %s51 = sphi 0, %s50
      %s67 = sphi 0, %s51
      %s75 = sphi 0, %s77
      %s78 = sphi 0, %s75
      %s79 = sphi 0, %s78
      %s95 = sphi 0, %s79
      %s101 = sphi 0, %s103
      %s104 = sphi 0, %s101
      %s105 = sphi 0, %s104
      %s121 = sphi 0, %s105
      %s129 = sphi 0, %s131
      %s132 = sphi 0, %s129
      %s133 = sphi 0, %s132
      %s149 = sphi 0, %s133
    $region4: #{tpu_custom_call.1} parent=1 // loop_header_branch
      %19 = sbr.rel (%p17) target = $region8
    $region5: #{tpu_custom_call.1} parent=1 // loop_body
      %s21 = ssub.s32 %s16, 1
      %s22 = ssub.s32 %s16, 2
      %s32 = sadd.s32 1, %s25
      %p33 = scmp.ge.s32.totalorder %s32, 1
      %s34 = scalar_select %p33, 0, %s32
      %s35 = sadd.s32 1, %s24
      %s36 = scalar_select %p33, %s35, %s24
      %p37 = scmp.ge.s32.totalorder %s36, 1
      %s38 = scalar_select %p37, 0, %s36
      %s39 = sadd.s32 1, %s23
      %s40 = scalar_select %p37, %s39, %s23
      %p41 = scmp.ge.s32.totalorder %s40, 2
      %s42 = scalar_select %p41, 0, %s40
      %s43 = ssub.s32 %s23, %s42
      %s44 = ssub.s32 %s25, %s34
      %s45 = sor.u32 %s43, %s44
      %p46 = scmp.eq.s32.totalorder %s45, 0
      %s48 = sadd.s32 %s47, 1
      %s49 = scalar_select %p46, %s47, %s48
      %p52 = pneg %p46
      %p53 = scmp.eq.s32.totalorder %s16, 1
      %p54 = por %p52, %p53
      %p55 = scmp.ne.s32.totalorder %s47, %s50
      %p56 = scmp.eq.s32.totalorder %s16, 0
      %p57 = por %p55, %p56
      %p58 = scmp.ne.s32.totalorder %s47, %s50
      %p59 = scmp.eq.s32.totalorder %s21, 1
      %p60 = por %p58, %p59
      %p61 = scmp.ne.s32.totalorder %s50, %s51
      %p62 = scmp.eq.s32.totalorder %s21, 0
      %p63 = por %p61, %p62
      %p64 = scmp.ne.s32.totalorder %s50, %s51
      %p65 = scmp.eq.s32.totalorder %s22, 1
      %p66 = por %p64, %p65
      %p68 = scmp.ne.s32.totalorder %s51, %s67
      %p69 = scmp.eq.s32.totalorder %s22, 0
      %p70 = por %p68, %p69
      %s71 = ssub.s32 %s25, %s34
      %s72 = ssub.s32 %s24, %s38
      %s73 = sor.u32 %s71, %s72
      %p74 = scmp.eq.s32.totalorder %s73, 0
      %s76 = sadd.s32 %s75, 1
      %s77 = scalar_select %p74, %s75, %s76
      %p80 = pneg %p74
      %p81 = scmp.eq.s32.totalorder %s16, 1
      %p82 = por %p80, %p81
      %p83 = scmp.ne.s32.totalorder %s75, %s78
      %p84 = scmp.eq.s32.totalorder %s16, 0
      %p85 = por %p83, %p84
      %p86 = scmp.ne.s32.totalorder %s75, %s78
      %p87 = scmp.eq.s32.totalorder %s21, 1
      %p88 = por %p86, %p87
      %p89 = scmp.ne.s32.totalorder %s78, %s79
      %p90 = scmp.eq.s32.totalorder %s21, 0
      %p91 = por %p89, %p90
      %p92 = scmp.ne.s32.totalorder %s78, %s79
      %p93 = scmp.eq.s32.totalorder %s22, 1
      %p94 = por %p92, %p93
      %p96 = scmp.ne.s32.totalorder %s79, %s95
      %p97 = scmp.eq.s32.totalorder %s22, 0
      %p98 = por %p96, %p97
      %s99 = ssub.s32 %s24, %s38
      %p100 = scmp.eq.s32.totalorder %s99, 0
      %s102 = sadd.s32 %s101, 1
      %s103 = scalar_select %p100, %s101, %s102
      %p106 = pneg %p100
      %p107 = scmp.eq.s32.totalorder %s16, 1
      %p108 = por %p106, %p107
      %p109 = scmp.ne.s32.totalorder %s101, %s104
      %p110 = scmp.eq.s32.totalorder %s16, 0
      %p111 = por %p109, %p110
      %p112 = scmp.ne.s32.totalorder %s101, %s104
      %p113 = scmp.eq.s32.totalorder %s21, 1
      %p114 = por %p112, %p113
      %p115 = scmp.ne.s32.totalorder %s104, %s105
      %p116 = scmp.eq.s32.totalorder %s21, 0
      %p117 = por %p115, %p116
      %p118 = scmp.ne.s32.totalorder %s104, %s105
      %p119 = scmp.eq.s32.totalorder %s22, 1
      %p120 = por %p118, %p119
      %p122 = scmp.ne.s32.totalorder %s105, %s121
      %p123 = scmp.eq.s32.totalorder %s22, 0
      %p124 = por %p122, %p123
      %s125 = ssub.s32 %s23, %s42
      %s126 = ssub.s32 %s24, %s38
      %s127 = sor.u32 %s125, %s126
      %p128 = scmp.eq.s32.totalorder %s127, 0
      %s130 = sadd.s32 %s129, 1
      %s131 = scalar_select %p128, %s129, %s130
      %p134 = pneg %p128
      %p135 = scmp.eq.s32.totalorder %s16, 1
      %p136 = por %p134, %p135
      %p137 = scmp.ne.s32.totalorder %s129, %s132
      %p138 = scmp.eq.s32.totalorder %s16, 0
      %p139 = por %p137, %p138
      %p140 = scmp.ne.s32.totalorder %s129, %s132
      %p141 = scmp.eq.s32.totalorder %s21, 1
      %p142 = por %p140, %p141
      %p143 = scmp.ne.s32.totalorder %s132, %s133
      %p144 = scmp.eq.s32.totalorder %s21, 0
      %p145 = por %p143, %p144
      %p146 = scmp.ne.s32.totalorder %s132, %s133
      %p147 = scmp.eq.s32.totalorder %s22, 1
      %p148 = por %p146, %p147
      %p150 = scmp.ne.s32.totalorder %s133, %s149
      %p151 = scmp.eq.s32.totalorder %s22, 0
      %p152 = por %p150, %p151
      %p153 = scmp.le.s32.totalorder 1, %s16
      %p154 = scmp.lt.s32.totalorder %s16, 3
      %p155 = pnand %p153, %p154
      %p156 = pneg %p155
      // Predicated region
      $region9: #{tpu_custom_call.1} parent=5 // pred_check
        _
      $region10: #{tpu_custom_call.1} parent=5 // pred_check_branch
        %158 = sbr.rel (%p155) target = $region12
      $region11: #{tpu_custom_call.1} parent=5 // pred_region
        %s159 = ssub.s32 %s16, 1
        // Predicated region
        $region13: #{tpu_custom_call.1} parent=11 // pred_check
          %p160 = pneg %p91
        $region14: #{tpu_custom_call.1} parent=11 // pred_check_branch
          %162 = sbr.rel (%p160) target = $region16
        $region15: #{tpu_custom_call.1} parent=11 // pred_region
          %s163 = smul.u32 16, %s28
          %165 = vsyncadd [#allocation7], 0
          %s166 = sadd.s32 %s27, %s163
          %s167 = smul.addr %s166, 4
          %s168 = scalar_lea.hbm %s1, %s167
          %s169 = sshll.u32 %s168, 4
          %s170 = int_to_ptr.hbm [resolvable:$true] %s169
          %s171 = sshll.u32 [#allocation6], 4
          %s172 = int_to_ptr.vmem [resolvable:$true] %s171
          %177 = dma.hbm_to_vmem [thread:$0]  %s170, 1024, %s172, [#allocation7], 64, 64, 4
        $region16: #{tpu_custom_call.1} parent=11 // pred_fallthru
          _
        // Predicated region
        $region17: #{tpu_custom_call.1} parent=11 // pred_check
          %p178 = pneg %p117
        $region18: #{tpu_custom_call.1} parent=11 // pred_check_branch
          %180 = sbr.rel (%p178) target = $region20
        $region19: #{tpu_custom_call.1} parent=11 // pred_region
          %p181 = scmp.lt.s32.totalorder %s27, 0
          %s182 = scalar_select %p181, %s27, 0
          %s183 = scalar_lea.vmem %s2, %s182
        $region20: #{tpu_custom_call.1} parent=11 // pred_fallthru
          _
      $region12: #{tpu_custom_call.1} parent=5 // pred_fallthru
        _
      %p184 = scmp.lt.s32.totalorder %s16, 2
      // Predicated region
      $region21: #{tpu_custom_call.1} parent=5 // pred_check
        %p185 = pneg %p184
      $region22: #{tpu_custom_call.1} parent=5 // pred_check_branch
        %187 = sbr.rel (%p185) target = $region24
      $region23: #{tpu_custom_call.1} parent=5 // pred_region
        // Predicated region
        $region25: #{tpu_custom_call.1} parent=23 // pred_check
          %p188 = pneg %p57
        $region26: #{tpu_custom_call.1} parent=23 // pred_check_branch
          %190 = sbr.rel (%p188) target = $region28
        $region27: #{tpu_custom_call.1} parent=23 // pred_region
          %s191 = sand.u32 %s47, 1
          %s192 = scalar_lea.sflag [#allocation4], %s191
          %s193 = sand.u32 %s47, 1
          %s194 = smul.addr %s193, 128
          %s195 = scalar_lea.vmem [#allocation3], %s194
          %s196 = smul.u32 32, %s23
          %198 = vsyncadd %s192, 0
          %s199 = sadd.s32 %s25, %s196
          %s200 = smul.addr %s199, 4
          %s201 = scalar_lea.hbm %s0, %s200
          %s202 = sshll.u32 %s201, 4
          %s203 = int_to_ptr.hbm [resolvable:$true] %s202
          %s204 = sshll.u32 %s195, 4
          %s205 = int_to_ptr.vmem [resolvable:$true] %s204
          %210 = dma.hbm_to_vmem [thread:$0]  %s203, 2048, %s205, %s192, 64, 64, 4
        $region28: #{tpu_custom_call.1} parent=23 // pred_fallthru
          _
      $region24: #{tpu_custom_call.1} parent=5 // pred_fallthru
        _
      %p211 = scmp.le.s32.totalorder 1, %s16
      %p212 = scmp.lt.s32.totalorder %s16, 3
      %p213 = pnand %p211, %p212
      %p214 = pneg %p213
      // Predicated region
      $region29: #{tpu_custom_call.1} parent=5 // pred_check
        _
      $region30: #{tpu_custom_call.1} parent=5 // pred_check_branch
        %216 = sbr.rel (%p213) target = $region32
      $region31: #{tpu_custom_call.1} parent=5 // pred_region
        %s217 = ssub.s32 %s16, 1
        %s218 = sand.u32 %s50, 1
        %s219 = scalar_lea.sflag [#allocation4], %s218
        %s220 = sand.u32 %s50, 1
        %s221 = smul.addr %s220, 128
        %s222 = scalar_lea.vmem [#allocation3], %s221
        // Predicated region
        $region33: #{tpu_custom_call.1} parent=31 // pred_check
          %p223 = pneg %p63
        $region34: #{tpu_custom_call.1} parent=31 // pred_check_branch
          %225 = sbr.rel (%p223) target = $region36
        $region35: #{tpu_custom_call.1} parent=31 // pred_region
          %227 = dma.done %s219, 2048
        $region36: #{tpu_custom_call.1} parent=31 // pred_fallthru
          _
        // Predicated region
        $region37: #{tpu_custom_call.1} parent=31 // pred_check
          %p228 = pneg %p91
        $region38: #{tpu_custom_call.1} parent=31 // pred_check_branch
          %230 = sbr.rel (%p228) target = $region40
        $region39: #{tpu_custom_call.1} parent=31 // pred_region
          %232 = dma.done [#allocation7], 1024
        $region40: #{tpu_custom_call.1} parent=31 // pred_fallthru
          _
        %s233 = sand.u32 %s50, 1
        %s234 = scalar_lea.sflag [#allocation4], %s233
        %s235 = sand.u32 %s50, 1
        %s236 = smul.addr %s235, 128
        %s237 = scalar_lea.vmem [#allocation3], %s236
        %p238 = pneg %p63
        %p239 = pneg %p60
        %p240 = pneg %p91
        %p241 = pneg %p88
        %p242 = scmp.lt.s32.totalorder %s27, 0
        %s243 = scalar_select %p242, %s27, 0
        %s244 = scalar_lea.vmem %s2, %s243
        %p245 = pneg %p117
        %p246 = pneg %p114
        %p247 = pneg %p145
        %p248 = pneg %p142
        %s249 = sand.u32 %s132, 1
        %s250 = scalar_lea.sflag [#allocation5], %s249
        %s251 = sand.u32 %s132, 1
        %s252 = smul.addr %s251, 256
        %s253 = scalar_lea.vmem [#allocation8], %s252
        %s254 = smul.u32 32, %s26
        %s255 = smul.u32 16, %s28
        %p256 = scmp.lt.s32.totalorder %s27, 0
        %s257 = scalar_select %p256, %s27, 0
        %s258 = scalar_lea.vmem %s2, %s257
        %s259 = smul.u32 32, %s26
        %p260 = scmp.eq.s32.totalorder %s28, 0
        // Predicated region
        $region41: #{tpu_custom_call.1} parent=31 // pred_check
          %p261 = pneg %p260
        $region42: #{tpu_custom_call.1} parent=31 // pred_check_branch
          %263 = sbr.rel (%p261) target = $region44
        $region43: #{tpu_custom_call.1} parent=31 // pred_region
          %264 = vst [vmem:[#allocation2] sm:$0xff] 0.0
          %265 = vst [vmem:[#allocation2 + $0x8] sm:$0xff] 0.0
          %266 = vst [vmem:[#allocation2 + $0x10] sm:$0xff] 0.0
          %267 = vst [vmem:[#allocation2 + $0x18] sm:$0xff] 0.0
          %268 = vst [vmem:[#allocation2 + $0x20] sm:$0xff] 0.0
          %269 = vst [vmem:[#allocation2 + $0x28] sm:$0xff] 0.0
          %270 = vst [vmem:[#allocation2 + $0x30] sm:$0xff] 0.0
          %271 = vst [vmem:[#allocation2 + $0x38] sm:$0xff] 0.0
          %272 = vst [vmem:[#allocation2 + $0x40] sm:$0xff] 0.0
          %273 = vst [vmem:[#allocation2 + $0x48] sm:$0xff] 0.0
          %274 = vst [vmem:[#allocation2 + $0x50] sm:$0xff] 0.0
          %275 = vst [vmem:[#allocation2 + $0x58] sm:$0xff] 0.0
          %276 = vst [vmem:[#allocation2 + $0x60] sm:$0xff] 0.0
          %277 = vst [vmem:[#allocation2 + $0x68] sm:$0xff] 0.0
          %278 = vst [vmem:[#allocation2 + $0x70] sm:$0xff] 0.0
          %279 = vst [vmem:[#allocation2 + $0x78] sm:$0xff] 0.0
          %280 = vst [vmem:[#allocation2 + $0x80] sm:$0xff] 0.0
          %281 = vst [vmem:[#allocation2 + $0x88] sm:$0xff] 0.0
          %282 = vst [vmem:[#allocation2 + $0x90] sm:$0xff] 0.0
          %283 = vst [vmem:[#allocation2 + $0x98] sm:$0xff] 0.0
          %284 = vst [vmem:[#allocation2 + $0xa0] sm:$0xff] 0.0
          %285 = vst [vmem:[#allocation2 + $0xa8] sm:$0xff] 0.0
          %286 = vst [vmem:[#allocation2 + $0xb0] sm:$0xff] 0.0
          %287 = vst [vmem:[#allocation2 + $0xb8] sm:$0xff] 0.0
          %288 = vst [vmem:[#allocation2 + $0xc0] sm:$0xff] 0.0
          %289 = vst [vmem:[#allocation2 + $0xc8] sm:$0xff] 0.0
          %290 = vst [vmem:[#allocation2 + $0xd0] sm:$0xff] 0.0
          %291 = vst [vmem:[#allocation2 + $0xd8] sm:$0xff] 0.0
          %292 = vst [vmem:[#allocation2 + $0xe0] sm:$0xff] 0.0
          %293 = vst [vmem:[#allocation2 + $0xe8] sm:$0xff] 0.0
          %294 = vst [vmem:[#allocation2 + $0xf0] sm:$0xff] 0.0
          %295 = vst [vmem:[#allocation2 + $0xf8] sm:$0xff] 0.0
        $region44: #{tpu_custom_call.1} parent=31 // pred_fallthru
          _
        %v296 = vld [vmem:[#allocation2] sm:$0xff]
        %v297 = vld [vmem:[#allocation2 + $0x8] sm:$0xff]
        %v298 = vld [vmem:[#allocation2 + $0x10] sm:$0xff]
        %v299 = vld [vmem:[#allocation2 + $0x18] sm:$0xff]
        %v300 = vld [vmem:[#allocation2 + $0x20] sm:$0xff]
        %v301 = vld [vmem:[#allocation2 + $0x28] sm:$0xff]
        %v302 = vld [vmem:[#allocation2 + $0x30] sm:$0xff]
        %v303 = vld [vmem:[#allocation2 + $0x38] sm:$0xff]
        %v304 = vld [vmem:[#allocation2 + $0x40] sm:$0xff]
        %v305 = vld [vmem:[#allocation2 + $0x48] sm:$0xff]
        %v306 = vld [vmem:[#allocation2 + $0x50] sm:$0xff]
        %v307 = vld [vmem:[#allocation2 + $0x58] sm:$0xff]
        %v308 = vld [vmem:[#allocation2 + $0x60] sm:$0xff]
        %v309 = vld [vmem:[#allocation2 + $0x68] sm:$0xff]
        %v310 = vld [vmem:[#allocation2 + $0x70] sm:$0xff]
        %v311 = vld [vmem:[#allocation2 + $0x78] sm:$0xff]
        %v312 = vld [vmem:[#allocation2 + $0x80] sm:$0xff]
        %v313 = vld [vmem:[#allocation2 + $0x88] sm:$0xff]
        %v314 = vld [vmem:[#allocation2 + $0x90] sm:$0xff]
        %v315 = vld [vmem:[#allocation2 + $0x98] sm:$0xff]
        %v316 = vld [vmem:[#allocation2 + $0xa0] sm:$0xff]
        %v317 = vld [vmem:[#allocation2 + $0xa8] sm:$0xff]
        %v318 = vld [vmem:[#allocation2 + $0xb0] sm:$0xff]
        %v319 = vld [vmem:[#allocation2 + $0xb8] sm:$0xff]
        %v320 = vld [vmem:[#allocation2 + $0xc0] sm:$0xff]
        %v321 = vld [vmem:[#allocation2 + $0xc8] sm:$0xff]
        %v322 = vld [vmem:[#allocation2 + $0xd0] sm:$0xff]
        %v323 = vld [vmem:[#allocation2 + $0xd8] sm:$0xff]
        %v324 = vld [vmem:[#allocation2 + $0xe0] sm:$0xff]
        %v325 = vld [vmem:[#allocation2 + $0xe8] sm:$0xff]
        %v326 = vld [vmem:[#allocation2 + $0xf0] sm:$0xff]
        %v327 = vld [vmem:[#allocation2 + $0xf8] sm:$0xff]
        %v328 = vld [vmem:[%s222] sm:$0xf]
        %v329 = vld [vmem:[%s222 + $0x4] sm:$0xf]
        %v330 = vld [vmem:[%s222 + $0x8] sm:$0xf]
        %v331 = vld [vmem:[%s222 + $0xc] sm:$0xf]
        %v332 = vld [vmem:[%s222 + $0x10] sm:$0xf]
        %v333 = vld [vmem:[%s222 + $0x14] sm:$0xf]
        %v334 = vld [vmem:[%s222 + $0x18] sm:$0xf]
        %v335 = vld [vmem:[%s222 + $0x1c] sm:$0xf]
        %v336 = vld [vmem:[%s222 + $0x20] sm:$0xf]
        %v337 = vld [vmem:[%s222 + $0x24] sm:$0xf]
        %v338 = vld [vmem:[%s222 + $0x28] sm:$0xf]
        %v339 = vld [vmem:[%s222 + $0x2c] sm:$0xf]
        %v340 = vld [vmem:[%s222 + $0x30] sm:$0xf]
        %v341 = vld [vmem:[%s222 + $0x34] sm:$0xf]
        %v342 = vld [vmem:[%s222 + $0x38] sm:$0xf]
        %v343 = vld [vmem:[%s222 + $0x3c] sm:$0xf]
        %v344 = vld [vmem:[%s222 + $0x40] sm:$0xf]
        %v345 = vld [vmem:[%s222 + $0x44] sm:$0xf]
        %v346 = vld [vmem:[%s222 + $0x48] sm:$0xf]
        %v347 = vld [vmem:[%s222 + $0x4c] sm:$0xf]
        %v348 = vld [vmem:[%s222 + $0x50] sm:$0xf]
        %v349 = vld [vmem:[%s222 + $0x54] sm:$0xf]
        %v350 = vld [vmem:[%s222 + $0x58] sm:$0xf]
        %v351 = vld [vmem:[%s222 + $0x5c] sm:$0xf]
        %v352 = vld [vmem:[%s222 + $0x60] sm:$0xf]
        %v353 = vld [vmem:[%s222 + $0x64] sm:$0xf]
        %v354 = vld [vmem:[%s222 + $0x68] sm:$0xf]
        %v355 = vld [vmem:[%s222 + $0x6c] sm:$0xf]
        %v356 = vld [vmem:[%s222 + $0x70] sm:$0xf]
        %v357 = vld [vmem:[%s222 + $0x74] sm:$0xf]
        %v358 = vld [vmem:[%s222 + $0x78] sm:$0xf]
        %v359 = vld [vmem:[%s222 + $0x7c] sm:$0xf]
        %v360 = vld [vmem:[#allocation6] sm:$0xf]
        %v361 = vld [vmem:[#allocation6 + $0x4] sm:$0xf]
        %v362 = vld [vmem:[#allocation6 + $0x8] sm:$0xf]
        %v363 = vld [vmem:[#allocation6 + $0xc] sm:$0xf]
        %v364 = vld [vmem:[#allocation6 + $0x10] sm:$0xf]
        %v365 = vld [vmem:[#allocation6 + $0x14] sm:$0xf]
        %v366 = vld [vmem:[#allocation6 + $0x18] sm:$0xf]
        %v367 = vld [vmem:[#allocation6 + $0x1c] sm:$0xf]
        %v368 = vld [vmem:[#allocation6 + $0x20] sm:$0xf]
        %v369 = vld [vmem:[#allocation6 + $0x24] sm:$0xf]
        %v370 = vld [vmem:[#allocation6 + $0x28] sm:$0xf]
        %v371 = vld [vmem:[#allocation6 + $0x2c] sm:$0xf]
        %v372 = vld [vmem:[#allocation6 + $0x30] sm:$0xf]
        %v373 = vld [vmem:[#allocation6 + $0x34] sm:$0xf]
        %v374 = vld [vmem:[#allocation6 + $0x38] sm:$0xf]
        %v375 = vld [vmem:[#allocation6 + $0x3c] sm:$0xf]
        %v408 = vunpack.c.l.b16 %v328
        %v409 = vunpack.c.l.b16 %v329
        %v410 = vunpack.c.l.b16 %v330
        %v411 = vunpack.c.l.b16 %v331
        %v412 = vunpack.c.l.b16 %v332
        %v413 = vunpack.c.l.b16 %v333
        %v414 = vunpack.c.l.b16 %v334
        %v415 = vunpack.c.l.b16 %v335
        %v416 = vunpack.c.l.b16 %v336
        %v417 = vunpack.c.l.b16 %v337
        %v418 = vunpack.c.l.b16 %v338
        %v419 = vunpack.c.l.b16 %v339
        %v420 = vunpack.c.l.b16 %v340
        %v421 = vunpack.c.l.b16 %v341
        %v422 = vunpack.c.l.b16 %v342
        %v423 = vunpack.c.l.b16 %v343
        %v424 = vunpack.c.l.b16 %v344
        %v425 = vunpack.c.l.b16 %v345
        %v426 = vunpack.c.l.b16 %v346
        %v427 = vunpack.c.l.b16 %v347
        %v428 = vunpack.c.l.b16 %v348
        %v429 = vunpack.c.l.b16 %v349
        %v430 = vunpack.c.l.b16 %v350
        %v431 = vunpack.c.l.b16 %v351
        %v432 = vunpack.c.l.b16 %v352
        %v433 = vunpack.c.l.b16 %v353
        %v434 = vunpack.c.l.b16 %v354
        %v435 = vunpack.c.l.b16 %v355
        %v436 = vunpack.c.l.b16 %v356
        %v437 = vunpack.c.l.b16 %v357
        %v438 = vunpack.c.l.b16 %v358
        %v439 = vunpack.c.l.b16 %v359
        %v440 = vpack.c.b16 %v409, %v408
        %v441 = vpack.c.b16 %v411, %v410
        %v442 = vpack.c.b16 %v413, %v412
        %v443 = vpack.c.b16 %v415, %v414
        %v444 = vpack.c.b16 %v417, %v416
        %v445 = vpack.c.b16 %v419, %v418
        %v446 = vpack.c.b16 %v421, %v420
        %v447 = vpack.c.b16 %v423, %v422
        %v448 = vpack.c.b16 %v425, %v424
        %v449 = vpack.c.b16 %v427, %v426
        %v450 = vpack.c.b16 %v429, %v428
        %v451 = vpack.c.b16 %v431, %v430
        %v452 = vpack.c.b16 %v433, %v432
        %v453 = vpack.c.b16 %v435, %v434
        %v454 = vpack.c.b16 %v437, %v436
        %v455 = vpack.c.b16 %v439, %v438
        %v488 = vunpack.c.l.b16 %v360
        %v489 = vunpack.c.l.b16 %v361
        %v490 = vunpack.c.l.b16 %v362
        %v491 = vunpack.c.l.b16 %v363
        %v492 = vunpack.c.l.b16 %v364
        %v493 = vunpack.c.l.b16 %v365
        %v494 = vunpack.c.l.b16 %v366
        %v495 = vunpack.c.l.b16 %v367
        %v496 = vunpack.c.l.b16 %v368
        %v497 = vunpack.c.l.b16 %v369
        %v498 = vunpack.c.l.b16 %v370
        %v499 = vunpack.c.l.b16 %v371
        %v500 = vunpack.c.l.b16 %v372
        %v501 = vunpack.c.l.b16 %v373
        %v502 = vunpack.c.l.b16 %v374
        %v503 = vunpack.c.l.b16 %v375
        %v504 = vpack.c.b16 %v489, %v488
        %v505 = vpack.c.b16 %v491, %v490
        %v506 = vpack.c.b16 %v493, %v492
        %v507 = vpack.c.b16 %v495, %v494
        %v508 = vpack.c.b16 %v497, %v496
        %v509 = vpack.c.b16 %v499, %v498
        %v510 = vpack.c.b16 %v501, %v500
        %v511 = vpack.c.b16 %v503, %v502
        %520 = vmatpush.bf16.msra.mxu0 %v511
        %521 = vmatpush.bf16.msra.mxu0 %v510
        %522 = vmatpush.bf16.msra.mxu0 %v509
        %523 = vmatpush.bf16.msra.mxu0 %v508
        %524 = vmatpush.bf16.msra.mxu0 %v507
        %525 = vmatpush.bf16.msra.mxu0 %v506
        %526 = vmatpush.bf16.msra.mxu0 %v505
        %527 = vmatpush.bf16.msra.mxu0 %v504
        %528 = vmatmul.bf16.gmra.mxu0 %v440
        %v529 = vpop.f32.mrf.mxu0
        %v530 = vadd.f32 0.0, %v529
        %v531 = vpop.f32.mrf.mxu0
        %v532 = vadd.f32 0.0, %v531
        %533 = vmatmul.bf16.gmra.mxu0 %v441
        %v534 = vpop.f32.mrf.mxu0
        %v535 = vadd.f32 0.0, %v534
        %v536 = vpop.f32.mrf.mxu0
        %v537 = vadd.f32 0.0, %v536
        %538 = vmatmul.bf16.gmra.mxu0 %v442
        %v539 = vpop.f32.mrf.mxu0
        %v540 = vadd.f32 0.0, %v539
        %v541 = vpop.f32.mrf.mxu0
        %v542 = vadd.f32 0.0, %v541
        %543 = vmatmul.bf16.gmra.mxu0 %v443
        %v544 = vpop.f32.mrf.mxu0
        %v545 = vadd.f32 0.0, %v544
        %v546 = vpop.f32.mrf.mxu0
        %v547 = vadd.f32 0.0, %v546
        %548 = vmatmul.bf16.gmra.mxu0 %v444
        %v549 = vpop.f32.mrf.mxu0
        %v550 = vadd.f32 0.0, %v549
        %v551 = vpop.f32.mrf.mxu0
        %v552 = vadd.f32 0.0, %v551
        %553 = vmatmul.bf16.gmra.mxu0 %v445
        %v554 = vpop.f32.mrf.mxu0
        %v555 = vadd.f32 0.0, %v554
        %v556 = vpop.f32.mrf.mxu0
        %v557 = vadd.f32 0.0, %v556
        %558 = vmatmul.bf16.gmra.mxu0 %v446
        %v559 = vpop.f32.mrf.mxu0
        %v560 = vadd.f32 0.0, %v559
        %v561 = vpop.f32.mrf.mxu0
        %v562 = vadd.f32 0.0, %v561
        %563 = vmatmul.bf16.gmra.mxu0 %v447
        %v564 = vpop.f32.mrf.mxu0
        %v565 = vadd.f32 0.0, %v564
        %v566 = vpop.f32.mrf.mxu0
        %v567 = vadd.f32 0.0, %v566
        %568 = vmatmul.bf16.gmra.mxu0 %v448
        %v569 = vpop.f32.mrf.mxu0
        %v570 = vadd.f32 0.0, %v569
        %v571 = vpop.f32.mrf.mxu0
        %v572 = vadd.f32 0.0, %v571
        %573 = vmatmul.bf16.gmra.mxu0 %v449
        %v574 = vpop.f32.mrf.mxu0
        %v575 = vadd.f32 0.0, %v574
        %v576 = vpop.f32.mrf.mxu0
        %v577 = vadd.f32 0.0, %v576
        %578 = vmatmul.bf16.gmra.mxu0 %v450
        %v579 = vpop.f32.mrf.mxu0
        %v580 = vadd.f32 0.0, %v579
        %v581 = vpop.f32.mrf.mxu0
        %v582 = vadd.f32 0.0, %v581
        %583 = vmatmul.bf16.gmra.mxu0 %v451
        %v584 = vpop.f32.mrf.mxu0
        %v585 = vadd.f32 0.0, %v584
        %v586 = vpop.f32.mrf.mxu0
        %v587 = vadd.f32 0.0, %v586
        %588 = vmatmul.bf16.gmra.mxu0 %v452
        %v589 = vpop.f32.mrf.mxu0
        %v590 = vadd.f32 0.0, %v589
        %v591 = vpop.f32.mrf.mxu0
        %v592 = vadd.f32 0.0, %v591
        %593 = vmatmul.bf16.gmra.mxu0 %v453
        %v594 = vpop.f32.mrf.mxu0
        %v595 = vadd.f32 0.0, %v594
        %v596 = vpop.f32.mrf.mxu0
        %v597 = vadd.f32 0.0, %v596
        %598 = vmatmul.bf16.gmra.mxu0 %v454
        %v599 = vpop.f32.mrf.mxu0
        %v600 = vadd.f32 0.0, %v599
        %v601 = vpop.f32.mrf.mxu0
        %v602 = vadd.f32 0.0, %v601
        %603 = vmatmul.bf16.gmra.mxu0 %v455
        %v604 = vpop.f32.mrf.mxu0
        %v605 = vadd.f32 0.0, %v604
        %v606 = vpop.f32.mrf.mxu0
        %v607 = vadd.f32 0.0, %v606
        %608 = vdwg.mxu0
        %v609 = vadd.f32 %v296, %v530
        %v610 = vadd.f32 %v297, %v532
        %v611 = vadd.f32 %v298, %v535
        %v612 = vadd.f32 %v299, %v537
        %v613 = vadd.f32 %v300, %v540
        %v614 = vadd.f32 %v301, %v542
        %v615 = vadd.f32 %v302, %v545
        %v616 = vadd.f32 %v303, %v547
        %v617 = vadd.f32 %v304, %v550
        %v618 = vadd.f32 %v305, %v552
        %v619 = vadd.f32 %v306, %v555
        %v620 = vadd.f32 %v307, %v557
        %v621 = vadd.f32 %v308, %v560
        %v622 = vadd.f32 %v309, %v562
        %v623 = vadd.f32 %v310, %v565
        %v624 = vadd.f32 %v311, %v567
        %v625 = vadd.f32 %v312, %v570
        %v626 = vadd.f32 %v313, %v572
        %v627 = vadd.f32 %v314, %v575
        %v628 = vadd.f32 %v315, %v577
        %v629 = vadd.f32 %v316, %v580
        %v630 = vadd.f32 %v317, %v582
        %v631 = vadd.f32 %v318, %v585
        %v632 = vadd.f32 %v319, %v587
        %v633 = vadd.f32 %v320, %v590
        %v634 = vadd.f32 %v321, %v592
        %v635 = vadd.f32 %v322, %v595
        %v636 = vadd.f32 %v323, %v597
        %v637 = vadd.f32 %v324, %v600
        %v638 = vadd.f32 %v325, %v602
        %v639 = vadd.f32 %v326, %v605
        %v640 = vadd.f32 %v327, %v607
        %641 = vst [vmem:[#allocation2] sm:$0xff] %v609
        %642 = vst [vmem:[#allocation2 + $0x8] sm:$0xff] %v610
        %643 = vst [vmem:[#allocation2 + $0x10] sm:$0xff] %v611
        %644 = vst [vmem:[#allocation2 + $0x18] sm:$0xff] %v612
        %645 = vst [vmem:[#allocation2 + $0x20] sm:$0xff] %v613
        %646 = vst [vmem:[#allocation2 + $0x28] sm:$0xff] %v614
        %647 = vst [vmem:[#allocation2 + $0x30] sm:$0xff] %v615
        %648 = vst [vmem:[#allocation2 + $0x38] sm:$0xff] %v616
        %649 = vst [vmem:[#allocation2 + $0x40] sm:$0xff] %v617
        %650 = vst [vmem:[#allocation2 + $0x48] sm:$0xff] %v618
        %651 = vst [vmem:[#allocation2 + $0x50] sm:$0xff] %v619
        %652 = vst [vmem:[#allocation2 + $0x58] sm:$0xff] %v620
        %653 = vst [vmem:[#allocation2 + $0x60] sm:$0xff] %v621
        %654 = vst [vmem:[#allocation2 + $0x68] sm:$0xff] %v622
        %655 = vst [vmem:[#allocation2 + $0x70] sm:$0xff] %v623
        %656 = vst [vmem:[#allocation2 + $0x78] sm:$0xff] %v624
        %657 = vst [vmem:[#allocation2 + $0x80] sm:$0xff] %v625
        %658 = vst [vmem:[#allocation2 + $0x88] sm:$0xff] %v626
        %659 = vst [vmem:[#allocation2 + $0x90] sm:$0xff] %v627
        %660 = vst [vmem:[#allocation2 + $0x98] sm:$0xff] %v628
        %661 = vst [vmem:[#allocation2 + $0xa0] sm:$0xff] %v629
        %662 = vst [vmem:[#allocation2 + $0xa8] sm:$0xff] %v630
        %663 = vst [vmem:[#allocation2 + $0xb0] sm:$0xff] %v631
        %664 = vst [vmem:[#allocation2 + $0xb8] sm:$0xff] %v632
        %665 = vst [vmem:[#allocation2 + $0xc0] sm:$0xff] %v633
        %666 = vst [vmem:[#allocation2 + $0xc8] sm:$0xff] %v634
        %667 = vst [vmem:[#allocation2 + $0xd0] sm:$0xff] %v635
        %668 = vst [vmem:[#allocation2 + $0xd8] sm:$0xff] %v636
        %669 = vst [vmem:[#allocation2 + $0xe0] sm:$0xff] %v637
        %670 = vst [vmem:[#allocation2 + $0xe8] sm:$0xff] %v638
        %671 = vst [vmem:[#allocation2 + $0xf0] sm:$0xff] %v639
        %672 = vst [vmem:[#allocation2 + $0xf8] sm:$0xff] %v640
        // Predicated region
        $region45: #{tpu_custom_call.1} parent=31 // pred_check
          %p673 = pneg %p260
        $region46: #{tpu_custom_call.1} parent=31 // pred_check_branch
          %675 = sbr.rel (%p673) target = $region48
        $region47: #{tpu_custom_call.1} parent=31 // pred_region
          %v676 = vld [vmem:[#allocation2] sm:$0xff]
          %v677 = vld [vmem:[#allocation2 + $0x8] sm:$0xff]
          %v678 = vld [vmem:[#allocation2 + $0x10] sm:$0xff]
          %v679 = vld [vmem:[#allocation2 + $0x18] sm:$0xff]
          %v680 = vld [vmem:[#allocation2 + $0x20] sm:$0xff]
          %v681 = vld [vmem:[#allocation2 + $0x28] sm:$0xff]
          %v682 = vld [vmem:[#allocation2 + $0x30] sm:$0xff]
          %v683 = vld [vmem:[#allocation2 + $0x38] sm:$0xff]
          %v684 = vld [vmem:[#allocation2 + $0x40] sm:$0xff]
          %v685 = vld [vmem:[#allocation2 + $0x48] sm:$0xff]
          %v686 = vld [vmem:[#allocation2 + $0x50] sm:$0xff]
          %v687 = vld [vmem:[#allocation2 + $0x58] sm:$0xff]
          %v688 = vld [vmem:[#allocation2 + $0x60] sm:$0xff]
          %v689 = vld [vmem:[#allocation2 + $0x68] sm:$0xff]
          %v690 = vld [vmem:[#allocation2 + $0x70] sm:$0xff]
          %v691 = vld [vmem:[#allocation2 + $0x78] sm:$0xff]
          %v692 = vld [vmem:[#allocation2 + $0x80] sm:$0xff]
          %v693 = vld [vmem:[#allocation2 + $0x88] sm:$0xff]
          %v694 = vld [vmem:[#allocation2 + $0x90] sm:$0xff]
          %v695 = vld [vmem:[#allocation2 + $0x98] sm:$0xff]
          %v696 = vld [vmem:[#allocation2 + $0xa0] sm:$0xff]
          %v697 = vld [vmem:[#allocation2 + $0xa8] sm:$0xff]
          %v698 = vld [vmem:[#allocation2 + $0xb0] sm:$0xff]
          %v699 = vld [vmem:[#allocation2 + $0xb8] sm:$0xff]
          %v700 = vld [vmem:[#allocation2 + $0xc0] sm:$0xff]
          %v701 = vld [vmem:[#allocation2 + $0xc8] sm:$0xff]
          %v702 = vld [vmem:[#allocation2 + $0xd0] sm:$0xff]
          %v703 = vld [vmem:[#allocation2 + $0xd8] sm:$0xff]
          %v704 = vld [vmem:[#allocation2 + $0xe0] sm:$0xff]
          %v705 = vld [vmem:[#allocation2 + $0xe8] sm:$0xff]
          %v706 = vld [vmem:[#allocation2 + $0xf0] sm:$0xff]
          %v707 = vld [vmem:[#allocation2 + $0xf8] sm:$0xff]
          %v708 = vld [vmem:[%s258] sm:$0x1]
          %v710 = vperm.slane %v708, 0
          %v712 = vadd.f32 %v676, %v710
          %v713 = vadd.f32 %v677, %v710
          %v714 = vadd.f32 %v678, %v710
          %v715 = vadd.f32 %v679, %v710
          %v716 = vadd.f32 %v680, %v710
          %v717 = vadd.f32 %v681, %v710
          %v718 = vadd.f32 %v682, %v710
          %v719 = vadd.f32 %v683, %v710
          %v720 = vadd.f32 %v684, %v710
          %v721 = vadd.f32 %v685, %v710
          %v722 = vadd.f32 %v686, %v710
          %v723 = vadd.f32 %v687, %v710
          %v724 = vadd.f32 %v688, %v710
          %v725 = vadd.f32 %v689, %v710
          %v726 = vadd.f32 %v690, %v710
          %v727 = vadd.f32 %v691, %v710
          %v728 = vadd.f32 %v692, %v710
          %v729 = vadd.f32 %v693, %v710
          %v730 = vadd.f32 %v694, %v710
          %v731 = vadd.f32 %v695, %v710
          %v732 = vadd.f32 %v696, %v710
          %v733 = vadd.f32 %v697, %v710
          %v734 = vadd.f32 %v698, %v710
          %v735 = vadd.f32 %v699, %v710
          %v736 = vadd.f32 %v700, %v710
          %v737 = vadd.f32 %v701, %v710
          %v738 = vadd.f32 %v702, %v710
          %v739 = vadd.f32 %v703, %v710
          %v740 = vadd.f32 %v704, %v710
          %v741 = vadd.f32 %v705, %v710
          %v742 = vadd.f32 %v706, %v710
          %v743 = vadd.f32 %v707, %v710
          %vm744 = vcmp.ge.f32.partialorder %v712, 0.0
          %vm745 = vcmp.ge.f32.partialorder %v713, 0.0
          %vm746 = vcmp.ge.f32.partialorder %v714, 0.0
          %vm747 = vcmp.ge.f32.partialorder %v715, 0.0
          %vm748 = vcmp.ge.f32.partialorder %v716, 0.0
          %vm749 = vcmp.ge.f32.partialorder %v717, 0.0
          %vm750 = vcmp.ge.f32.partialorder %v718, 0.0
          %vm751 = vcmp.ge.f32.partialorder %v719, 0.0
          %vm752 = vcmp.ge.f32.partialorder %v720, 0.0
          %vm753 = vcmp.ge.f32.partialorder %v721, 0.0
          %vm754 = vcmp.ge.f32.partialorder %v722, 0.0
          %vm755 = vcmp.ge.f32.partialorder %v723, 0.0
          %vm756 = vcmp.ge.f32.partialorder %v724, 0.0
          %vm757 = vcmp.ge.f32.partialorder %v725, 0.0
          %vm758 = vcmp.ge.f32.partialorder %v726, 0.0
          %vm759 = vcmp.ge.f32.partialorder %v727, 0.0
          %vm760 = vcmp.ge.f32.partialorder %v728, 0.0
          %vm761 = vcmp.ge.f32.partialorder %v729, 0.0
          %vm762 = vcmp.ge.f32.partialorder %v730, 0.0
          %vm763 = vcmp.ge.f32.partialorder %v731, 0.0
          %vm764 = vcmp.ge.f32.partialorder %v732, 0.0
          %vm765 = vcmp.ge.f32.partialorder %v733, 0.0
          %vm766 = vcmp.ge.f32.partialorder %v734, 0.0
          %vm767 = vcmp.ge.f32.partialorder %v735, 0.0
          %vm768 = vcmp.ge.f32.partialorder %v736, 0.0
          %vm769 = vcmp.ge.f32.partialorder %v737, 0.0
          %vm770 = vcmp.ge.f32.partialorder %v738, 0.0
          %vm771 = vcmp.ge.f32.partialorder %v739, 0.0
          %vm772 = vcmp.ge.f32.partialorder %v740, 0.0
          %vm773 = vcmp.ge.f32.partialorder %v741, 0.0
          %vm774 = vcmp.ge.f32.partialorder %v742, 0.0
          %vm775 = vcmp.ge.f32.partialorder %v743, 0.0
          %v776 = vmul.f32 %v712, 0.2
          %v777 = vmul.f32 %v713, 0.2
          %v778 = vmul.f32 %v714, 0.2
          %v779 = vmul.f32 %v715, 0.2
          %v780 = vmul.f32 %v716, 0.2
          %v781 = vmul.f32 %v717, 0.2
          %v782 = vmul.f32 %v718, 0.2
          %v783 = vmul.f32 %v719, 0.2
          %v784 = vmul.f32 %v720, 0.2
          %v785 = vmul.f32 %v721, 0.2
          %v786 = vmul.f32 %v722, 0.2
          %v787 = vmul.f32 %v723, 0.2
          %v788 = vmul.f32 %v724, 0.2
          %v789 = vmul.f32 %v725, 0.2
          %v790 = vmul.f32 %v726, 0.2
          %v791 = vmul.f32 %v727, 0.2
          %v792 = vmul.f32 %v728, 0.2
          %v793 = vmul.f32 %v729, 0.2
          %v794 = vmul.f32 %v730, 0.2
          %v795 = vmul.f32 %v731, 0.2
          %v796 = vmul.f32 %v732, 0.2
          %v797 = vmul.f32 %v733, 0.2
          %v798 = vmul.f32 %v734, 0.2
          %v799 = vmul.f32 %v735, 0.2
          %v800 = vmul.f32 %v736, 0.2
          %v801 = vmul.f32 %v737, 0.2
          %v802 = vmul.f32 %v738, 0.2
          %v803 = vmul.f32 %v739, 0.2
          %v804 = vmul.f32 %v740, 0.2
          %v805 = vmul.f32 %v741, 0.2
          %v806 = vmul.f32 %v742, 0.2
          %v807 = vmul.f32 %v743, 0.2
          %v808 = vsel %vm744, %v712, %v776
          %v809 = vsel %vm745, %v713, %v777
          %v810 = vsel %vm746, %v714, %v778
          %v811 = vsel %vm747, %v715, %v779
          %v812 = vsel %vm748, %v716, %v780
          %v813 = vsel %vm749, %v717, %v781
          %v814 = vsel %vm750, %v718, %v782
          %v815 = vsel %vm751, %v719, %v783
          %v816 = vsel %vm752, %v720, %v784
          %v817 = vsel %vm753, %v721, %v785
          %v818 = vsel %vm754, %v722, %v786
          %v819 = vsel %vm755, %v723, %v787
          %v820 = vsel %vm756, %v724, %v788
          %v821 = vsel %vm757, %v725, %v789
          %v822 = vsel %vm758, %v726, %v790
          %v823 = vsel %vm759, %v727, %v791
          %v824 = vsel %vm760, %v728, %v792
          %v825 = vsel %vm761, %v729, %v793
          %v826 = vsel %vm762, %v730, %v794
          %v827 = vsel %vm763, %v731, %v795
          %v828 = vsel %vm764, %v732, %v796
          %v829 = vsel %vm765, %v733, %v797
          %v830 = vsel %vm766, %v734, %v798
          %v831 = vsel %vm767, %v735, %v799
          %v832 = vsel %vm768, %v736, %v800
          %v833 = vsel %vm769, %v737, %v801
          %v834 = vsel %vm770, %v738, %v802
          %v835 = vsel %vm771, %v739, %v803
          %v836 = vsel %vm772, %v740, %v804
          %v837 = vsel %vm773, %v741, %v805
          %v838 = vsel %vm774, %v742, %v806
          %v839 = vsel %vm775, %v743, %v807
          %840 = vst [vmem:[%s253] sm:$0xff] %v808
          %841 = vst [vmem:[%s253 + $0x8] sm:$0xff] %v809
          %842 = vst [vmem:[%s253 + $0x10] sm:$0xff] %v810
          %843 = vst [vmem:[%s253 + $0x18] sm:$0xff] %v811
          %844 = vst [vmem:[%s253 + $0x20] sm:$0xff] %v812
          %845 = vst [vmem:[%s253 + $0x28] sm:$0xff] %v813
          %846 = vst [vmem:[%s253 + $0x30] sm:$0xff] %v814
          %847 = vst [vmem:[%s253 + $0x38] sm:$0xff] %v815
          %848 = vst [vmem:[%s253 + $0x40] sm:$0xff] %v816
          %849 = vst [vmem:[%s253 + $0x48] sm:$0xff] %v817
          %850 = vst [vmem:[%s253 + $0x50] sm:$0xff] %v818
          %851 = vst [vmem:[%s253 + $0x58] sm:$0xff] %v819
          %852 = vst [vmem:[%s253 + $0x60] sm:$0xff] %v820
          %853 = vst [vmem:[%s253 + $0x68] sm:$0xff] %v821
          %854 = vst [vmem:[%s253 + $0x70] sm:$0xff] %v822
          %855 = vst [vmem:[%s253 + $0x78] sm:$0xff] %v823
          %856 = vst [vmem:[%s253 + $0x80] sm:$0xff] %v824
          %857 = vst [vmem:[%s253 + $0x88] sm:$0xff] %v825
          %858 = vst [vmem:[%s253 + $0x90] sm:$0xff] %v826
          %859 = vst [vmem:[%s253 + $0x98] sm:$0xff] %v827
          %860 = vst [vmem:[%s253 + $0xa0] sm:$0xff] %v828
          %861 = vst [vmem:[%s253 + $0xa8] sm:$0xff] %v829
          %862 = vst [vmem:[%s253 + $0xb0] sm:$0xff] %v830
          %863 = vst [vmem:[%s253 + $0xb8] sm:$0xff] %v831
          %864 = vst [vmem:[%s253 + $0xc0] sm:$0xff] %v832
          %865 = vst [vmem:[%s253 + $0xc8] sm:$0xff] %v833
          %866 = vst [vmem:[%s253 + $0xd0] sm:$0xff] %v834
          %867 = vst [vmem:[%s253 + $0xd8] sm:$0xff] %v835
          %868 = vst [vmem:[%s253 + $0xe0] sm:$0xff] %v836
          %869 = vst [vmem:[%s253 + $0xe8] sm:$0xff] %v837
          %870 = vst [vmem:[%s253 + $0xf0] sm:$0xff] %v838
          %871 = vst [vmem:[%s253 + $0xf8] sm:$0xff] %v839
        $region48: #{tpu_custom_call.1} parent=31 // pred_fallthru
          _
        %s872 = sand.u32 %s132, 1
        %s873 = scalar_lea.sflag [#allocation5], %s872
        %s874 = sand.u32 %s132, 1
        %s875 = smul.addr %s874, 256
        %s876 = scalar_lea.vmem [#allocation8], %s875
        // Predicated region
        $region49: #{tpu_custom_call.1} parent=31 // pred_check
          %p877 = pneg %p142
        $region50: #{tpu_custom_call.1} parent=31 // pred_check_branch
          %879 = sbr.rel (%p877) target = $region52
        $region51: #{tpu_custom_call.1} parent=31 // pred_region
          %s880 = smul.u32 32, %s26
          %882 = vsyncadd %s873, 0
          %s883 = sadd.s32 %s27, %s880
          %s884 = smul.addr %s883, 8
          %s885 = scalar_lea.hbm %s3, %s884
          %s886 = sshll.u32 %s876, 4
          %s887 = int_to_ptr.vmem [resolvable:$true] %s886
          %s888 = sshll.u32 %s885, 4
          %s889 = int_to_ptr.hbm [resolvable:$true] %s888
          %894 = dma.vmem_to_hbm [thread:$0]  %s887, 4096, %s889, %s873, 128, 128, 8
        $region52: #{tpu_custom_call.1} parent=31 // pred_fallthru
          _
      $region32: #{tpu_custom_call.1} parent=5 // pred_fallthru
        _
      %p895 = scmp.le.s32.totalorder 2, %s16
      // Predicated region
      $region53: #{tpu_custom_call.1} parent=5 // pred_check
        %p896 = pneg %p895
      $region54: #{tpu_custom_call.1} parent=5 // pred_check_branch
        %898 = sbr.rel (%p896) target = $region56
      $region55: #{tpu_custom_call.1} parent=5 // pred_region
        %s899 = ssub.s32 %s16, 2
        // Predicated region
        $region57: #{tpu_custom_call.1} parent=55 // pred_check
          %p900 = pneg %p148
        $region58: #{tpu_custom_call.1} parent=55 // pred_check_branch
          %902 = sbr.rel (%p900) target = $region60
        $region59: #{tpu_custom_call.1} parent=55 // pred_region
          %s903 = sand.u32 %s133, 1
          %s904 = scalar_lea.sflag [#allocation5], %s903
          %s905 = sand.u32 %s133, 1
          %s906 = smul.addr %s905, 256
          %s907 = scalar_lea.vmem [#allocation8], %s906
          %909 = dma.done %s904, 4096
        $region60: #{tpu_custom_call.1} parent=55 // pred_fallthru
          _
      $region56: #{tpu_custom_call.1} parent=5 // pred_fallthru
        _
    $region6: #{tpu_custom_call.1} parent=1 // loop_footer
      %s20 = sadd.s32 1, %s16
    $region7: #{tpu_custom_call.1} parent=1 // loop_footer_branch
      %15 = sbr.rel target = $region3
    $region8: #{tpu_custom_call.1} parent=1 // loop_exit
      _
    %910 = vsyncpa [#allocation4], 1
    %s911 = scalar_lea.sflag [#allocation4], 1
    %912 = vsyncpa %s911, 1
    %913 = vsyncpa [#allocation7], 1
    %914 = vsyncpa [#allocation5], 1
    %s915 = scalar_lea.sflag [#allocation5], 1
    %916 = vsyncpa %s915, 1

</llo_original>
